<compile_context>
chip_gen: v7x
topology: tpu7x:2x2x1
jax: 0.10.0
libtpu: 0.0.40
codegen_flags: <defaults>
</compile_context>

<pallas_src>
import math
import functools

import jax
import jax.numpy as jnp
from jax import lax
from jax.experimental import pallas as pl
from jax.experimental.pallas import tpu as pltpu


NEG_INF_FILL = -1000000.0  # same fill value as the PyTorch sequence_mask reference


# --------------------------------------------------------------------------- kernel
def _attn_kernel(vlen_ref, q_ref, k_ref, v_ref, o_ref, *rest,
                 scale, block_b, return_weights):
    """One (batch-block, Tq-tile) per grid step.

    vlen_ref : SMEM (B,) int32 valid lengths (scalar prefetch, full array)
    q_ref    : VMEM (Bb, Tq_t, D)
    k_ref    : VMEM (Bb, Tk,  D)
    v_ref    : VMEM (Bb, Tk,  Dv)
    o_ref    : VMEM (Bb, Tq_t, Dv)       softmax(QK^T/sqrt(d)) @ V
    rest     : (w_ref,) VMEM (Bb, Tq_t, Tk) attention weights, iff return_weights
    """
    Tk = k_ref.shape[1]
    compute_dtype = k_ref.dtype

    # Fold 1/sqrt(d) into Q (cheapest place: Bb*Tq_t*D VPU multiplies).
    q = (q_ref[...].astype(jnp.float32) * jnp.float32(scale)).astype(compute_dtype)
    k = k_ref[...]
    v = v_ref[...]

    # scores = (Q/sqrt(d)) @ K^T — batched contraction, f32 accumulation, no transpose.
    scores = lax.dot_general(
        q, k,
        dimension_numbers=(((2,), (2,)), ((0,), (0,))),
        preferred_element_type=jnp.float32,
    )                                                           # (Bb, Tq_t, Tk) f32

    # sequence_mask: key positions >= valid_len get -1e6 BEFORE softmax (PyTorch ref).
    # Valid lengths come from SMEM scalars; build a small (Bb, 1, Tk) mask, broadcast.
    b_start = pl.program_id(0) * block_b
    col = lax.broadcasted_iota(jnp.int32, (block_b, 1, Tk), 2)   # key position
    bidx = lax.broadcasted_iota(jnp.int32, (block_b, 1, Tk), 0)  # batch row in block
    vlen = jnp.zeros((block_b, 1, Tk), jnp.int32)
    for i in range(block_b):                                     # block_b small & static
        vlen = jnp.where(bidx == i, vlen_ref[b_start + i], vlen)
    scores = jnp.where(col < vlen, scores, jnp.float32(NEG_INF_FILL))

    # numerically-stable softmax over the key axis
    m = jnp.max(scores, axis=-1, keepdims=True)
    e = jnp.exp(scores - m)
    s = jnp.sum(e, axis=-1, keepdims=True)

    if return_weights:
        w = e / s                              # exact normalization for emitted weights
        rest[0][...] = w.astype(rest[0].dtype)
        o = lax.dot_general(
            w.astype(v.dtype), v,
            dimension_numbers=(((2,), (1,)), ((0,), (0,))),
            preferred_element_type=jnp.float32)
    else:
        # Skip the Tk-wide normalization: P@V on un-normalized exp, then scale the
        # (Bb, Tq_t, Dv) result by 1/s — Tk/Dv fewer VALU multiplies, one fewer f32 tile.
        o = lax.dot_general(
            e.astype(v.dtype), v,
            dimension_numbers=(((2,), (1,)), ((0,), (0,))),
            preferred_element_type=jnp.float32)
        o = o * pl.reciprocal(s, approx=True)  # EUP slot, ~free

    # TODO(synk): nn.Dropout in training mode not implemented; eval mode is identity.
    o_ref[...] = o.astype(o_ref.dtype)


# ------------------------------------------------------------------- sizing helpers
def _round_up(x, m):
    return ((x + m - 1) // m) * m


def _padded_nbytes(shape, dtype):
    """VMEM footprint of a tile with (sublane, lane) padding applied."""
    dtype = jnp.dtype(dtype)
    sub = {4: 8, 2: 16, 1: 32}.get(dtype.itemsize, 8)
    dims = [int(d) for d in shape]
    if len(dims) >= 1:
        dims[-1] = _round_up(dims[-1], 128)
    if len(dims) >= 2:
        dims[-2] = _round_up(dims[-2], sub)
    n = 1
    for d in dims:
        n *= d
    return n * dtype.itemsize


def _vmem_info():
    """(physical capacity, usable budget) per TensorCore, generation-aware."""
    try:
        cap = int(pltpu.get_tpu_info().vmem_capacity_bytes)
    except Exception:
        cap = 64 << 20                      # conservative fallback (v7x-sized)
    if cap <= (80 << 20):                   # v7x-class: 64 MiB per TC -> ~52 MiB target
        budget = min(cap - (12 << 20), 52 << 20)
    else:                                   # v5e/v6e: 128 MiB -> ~104 MiB target
        budget = min(cap - (24 << 20), 104 << 20)
    return cap, max(budget, 8 << 20)


def _working_set_bytes(Bb, Tq_t, Tk, D, Dv, q_dt, k_dt, v_dt, o_dt, w_dt,
                       return_weights, kv_buffers):
    f32 = jnp.float32
    qb = _padded_nbytes((Bb, Tq_t, D), q_dt)
    kb = _padded_nbytes((Bb, Tk, D), k_dt)
    vb = _padded_nbytes((Bb, Tk, Dv), v_dt)
    ob = _padded_nbytes((Bb, Tq_t, Dv), o_dt)
    wb = _padded_nbytes((Bb, Tq_t, Tk), w_dt) if return_weights else 0
    pipelined = 2 * (qb + ob + wb) + kv_buffers * (kb + vb)
    live = (3 * _padded_nbytes((Bb, Tq_t, Tk), f32)       # scores / e / w
            + _padded_nbytes((Bb, Tq_t, D), f32)          # scaled Q temp
            + 2 * _padded_nbytes((Bb, Tq_t, 1), f32))     # m, s
    return pipelined + live + (2 << 20)                   # compiler scratch headroom


def _choose_tiles(B, Tq, Tk, D, Dv, q_dt, k_dt, v_dt, o_dt, w_dt, return_weights):
    """Tk-aware (Bb, Tq_t, kv_buffers) so the padded working set fits the VMEM budget."""
    _, budget = _vmem_info()

    bb_cands = [d for d in range(min(B, 8), 0, -1) if B % d == 0]
    divs = [d for d in range(1, Tq + 1) if Tq % d == 0]
    tq_cands = sorted({d for d in divs if d % 8 == 0} | {Tq}, reverse=True)
    capped = [d for d in tq_cands if d <= 2048]
    if capped:
        tq_cands = capped

    def ws(bb, tqt, kvb):
        return _working_set_bytes(bb, tqt, Tk, D, Dv, q_dt, k_dt, v_dt, o_dt, w_dt,
                                  return_weights, kvb)

    best = None
    for kvb in (2, 1):                      # prefer double-buffered K/V; drop to 1 if needed
        fitting = [(bb, tqt) for bb in bb_cands for tqt in tq_cands
                   if ws(bb, tqt, kvb) <= budget]
        if fitting:
            bb, tqt = max(fitting, key=lambda t: (t[0] * t[1], t[1]))
            best = (bb, tqt, kvb)
            break
    if best is None:
        # Nothing fits the target budget — take the smallest tile, single-buffered K/V.
        # TODO(synk): for very long Tk, a flash-style online-softmax Tk grid axis would
        # remove the O(Tq_t*Tk) f32 residency entirely.
        best = (bb_cands[-1], tq_cands[-1], 1)
    bb, tqt, kvb = best
    return bb, tqt, kvb, ws(bb, tqt, kvb)


# ------------------------------------------------------------------------- wrapper
def dot_product_attention(queries, keys, values, valid_lens=None,
                          return_weights=True, weights_dtype=None):
    """Pallas TPU implementation of DotProductAttention.forward (eval mode).

    queries: (B, Tq, D), keys: (B, Tk, D), values: (B, Tk, Dv),
    valid_lens: (B,) int or None (1-D case of the PyTorch module).
    Returns (output (B, Tq, Dv), attention_weights (B, Tq, Tk) or None).
    """
    B, Tq, D = queries.shape
    _, Tk, Dv = values.shape
    scale = 1.0 / math.sqrt(D)

    if valid_lens is None:
        vlens = jnp.full((B,), Tk, dtype=jnp.int32)
    else:
        vlens = jnp.asarray(valid_lens).astype(jnp.int32).reshape(B)
    # TODO(synk): 2-D (per-query) valid_lens variant of masked_softmax not implemented.

    o_dtype = queries.dtype
    # Weights default to the input dtype (bf16 in -> bf16 out, half the HBM writeback);
    # pass weights_dtype=jnp.float32 if exact-f32 weights are required downstream.
    w_dtype = jnp.dtype(weights_dtype) if weights_dtype is not None else jnp.dtype(o_dtype)

    Bb, Tq_t, kv_buffers, ws_bytes = _choose_tiles(
        B, Tq, Tk, D, Dv, queries.dtype, keys.dtype, values.dtype, o_dtype, w_dtype,
        return_weights)
    grid = (B // Bb, Tq // Tq_t)            # batch outer; K/V tiles reused across Tq tiles

    kv_kwargs = {} if kv_buffers == 2 else dict(pipeline_mode=pl.Buffered(kv_buffers))

    in_specs = [
        pl.BlockSpec((Bb, Tq_t, D), lambda b, q, vl: (b, q, 0)),              # Q
        pl.BlockSpec((Bb, Tk, D), lambda b, q, vl: (b, 0, 0), **kv_kwargs),   # K
        pl.BlockSpec((Bb, Tk, Dv), lambda b, q, vl: (b, 0, 0), **kv_kwargs),  # V
    ]
    out_specs = [pl.BlockSpec((Bb, Tq_t, Dv), lambda b, q, vl: (b, q, 0))]
    out_shapes = [jax.ShapeDtypeStruct((B, Tq, Dv), o_dtype)]
    if return_weights:
        out_specs.append(pl.BlockSpec((Bb, Tq_t, Tk), lambda b, q, vl: (b, q, 0)))
        out_shapes.append(jax.ShapeDtypeStruct((B, Tq, Tk), w_dtype))

    kernel = functools.partial(_attn_kernel, scale=scale, block_b=Bb,
                               return_weights=return_weights)

    cap, _ = _vmem_info()
    vmem_limit = int(min(cap, max(ws_bytes + (8 << 20), 32 << 20)))

    flops = 2 * B * Tq * Tk * (D + Dv)
    bytes_accessed = (
        queries.size * queries.dtype.itemsize
        + keys.size * keys.dtype.itemsize
        + values.size * values.dtype.itemsize
        + B * Tq * Dv * jnp.dtype(o_dtype).itemsize
        + (B * Tq * Tk * w_dtype.itemsize if return_weights else 0)
        + int(vlens.size) * 4)
    cost = pl.CostEstimate(flops=int(flops), transcendentals=int(B * Tq * Tk),
                           bytes_accessed=int(bytes_accessed))

    grid_spec = pltpu.PrefetchScalarGridSpec(
        num_scalar_prefetch=1,              # valid_lens -> SMEM; no VMEM DMA stream for it
        grid=grid,
        in_specs=in_specs,
        out_specs=out_specs,
    )

    result = pl.pallas_call(
        kernel,
        out_shape=tuple(out_shapes),
        grid_spec=grid_spec,
        cost_estimate=cost,
        compiler_params=pltpu.CompilerParams(
            dimension_semantics=("parallel", "parallel"),
            vmem_limit_bytes=vmem_limit,
        ),
    )(vlens, queries, keys, values)

    if return_weights:
        return result[0], result[1]
    return result[0], None


# ----------------------------------------------------------------------- reference
def _reference(queries, keys, values, valid_lens):
    """Pure-JAX reference mirroring the PyTorch forward."""
    d = queries.shape[-1]
    scores = jnp.einsum("bqd,bkd->bqk", queries, keys) / math.sqrt(d)
    if valid_lens is not None:
        mask = jnp.arange(scores.shape[-1])[None, None, :] < valid_lens[:, None, None]
        scores = jnp.where(mask, scores, NEG_INF_FILL)
    w = jax.nn.softmax(scores, axis=-1)
    return jnp.einsum("bqk,bkv->bqv", w, values), w


if __name__ == "__main__":
    key = jax.random.PRNGKey(0)
    kq, kk, kv = jax.random.split(key, 3)

    B, Tq, Tk, D, Dv = 2, 8, 8, 16, 32
    queries = jax.random.normal(kq, (B, Tq, D), dtype=jnp.float32)
    keys = jax.random.normal(kk, (B, Tk, D), dtype=jnp.float32)
    values = jax.random.normal(kv, (B, Tk, Dv), dtype=jnp.float32)
    valid_lens = jnp.array([3, 6], dtype=jnp.int32)

    out, attn_w = dot_product_attention(queries, keys, values, valid_lens)
    out = jax.block_until_ready(out)
    attn_w = jax.block_until_ready(attn_w)

    ref_out, ref_w = _reference(queries, keys, values, valid_lens)
    assert jnp.allclose(out, ref_out, atol=5e-3, rtol=5e-3)
    assert jnp.allclose(attn_w, ref_w, atol=5e-3, rtol=5e-3)

    # output-only fast path (no weights writeback, post-PV approx-reciprocal normalize)
    out2, _ = dot_product_attention(queries, keys, values, valid_lens,
                                    return_weights=False)
    out2 = jax.block_until_ready(out2)
    assert jnp.allclose(out2, ref_out, atol=5e-3, rtol=5e-3)

    # no-mask path (valid_lens=None -> plain softmax)
    out3, w3 = dot_product_attention(queries, keys, values, None)
    out3 = jax.block_until_ready(out3)
    ref_out3, _ = _reference(queries, keys, values, None)
    assert jnp.allclose(out3, ref_out3, atol=5e-3, rtol=5e-3)

    print("KERNEL_OK")
</pallas_src>

<mosaic_0001>
module attributes {stable_mosaic.version = 11 : i64} {
  func.func @_attn_kernel(%arg0: i32, %arg1: i32, %arg2: memref<2xi32, #tpu.memory_space<smem>>, %arg3: memref<2x8x16xf32, #tpu.memory_space<vmem>>, %arg4: memref<2x8x16xf32, #tpu.memory_space<vmem>>, %arg5: memref<2x8x32xf32, #tpu.memory_space<vmem>>, %arg6: memref<2x8x32xf32, #tpu.memory_space<vmem>>, %arg7: memref<2x8x8xf32, #tpu.memory_space<vmem>>) attributes {dimension_semantics = [#tpu.dimension_semantics<parallel>, #tpu.dimension_semantics<parallel>], iteration_bounds = array<i64: 1, 1>, scalar_prefetch = 1 : i64, scratch_operands = 0 : i64, tpu.core_type = #tpu.core_type<tc>, window_params = [{transform_indices = @transform_0, window_bounds = array<i64: 2, 8, 16>}, {transform_indices = @transform_1, window_bounds = array<i64: 2, 8, 16>}, {transform_indices = @transform_2, window_bounds = array<i64: 2, 8, 32>}, {transform_indices = @transform_3, window_bounds = array<i64: 2, 8, 32>}, {transform_indices = @transform_4, window_bounds = array<i64: 2, 8, 8>}]} {
    %c0 = arith.constant 0 : index
    %c0_0 = arith.constant 0 : index
    %c0_1 = arith.constant 0 : index
    %0 = vector.load %arg3[%c0, %c0_0, %c0_1] : memref<2x8x16xf32, #tpu.memory_space<vmem>>, vector<2x8x16xf32>
    %cst = arith.constant 2.500000e-01 : f32
    %1 = vector.broadcast %cst : f32 to vector<2x8x16xf32>
    %2 = arith.mulf %0, %1 : vector<2x8x16xf32>
    %c0_2 = arith.constant 0 : index
    %c0_3 = arith.constant 0 : index
    %c0_4 = arith.constant 0 : index
    %3 = vector.load %arg4[%c0_2, %c0_3, %c0_4] : memref<2x8x16xf32, #tpu.memory_space<vmem>>, vector<2x8x16xf32>
    %c0_5 = arith.constant 0 : index
    %c0_6 = arith.constant 0 : index
    %c0_7 = arith.constant 0 : index
    %4 = vector.load %arg5[%c0_5, %c0_6, %c0_7] : memref<2x8x32xf32, #tpu.memory_space<vmem>>, vector<2x8x32xf32>
    %cst_8 = arith.constant dense<0.000000e+00> : vector<2x8x8xf32>
    %5 = tpu.matmul %2, %3, %cst_8 {dimension_numbers = #tpu.dot_dimension_numbers<[2], [2], [1], [1], [0, 0, 0, 1, 1, 1], [0], [0]>} : vector<2x8x16xf32>, vector<2x8x16xf32>, vector<2x8x8xf32> -> vector<2x8x8xf32>
    %c2_i32 = arith.constant 2 : i32
    %6 = arith.muli %arg0, %c2_i32 : i32
    %7 = tpu.iota {dimensions = array<i32: 2>} : vector<2x1x8xi32>
    %8 = tpu.iota {dimensions = array<i32: 0>} : vector<2x1x8xi32>
    %c0_i32 = arith.constant 0 : i32
    %9 = vector.broadcast %c0_i32 : i32 to vector<2x1x8xi32>
    %c0_i32_9 = arith.constant 0 : i32
    %10 = vector.broadcast %c0_i32_9 : i32 to vector<2x1x8xi32>
    %11 = arith.cmpi eq, %8, %10 : vector<2x1x8xi32>
    %c0_i32_10 = arith.constant 0 : i32
    %12 = arith.addi %6, %c0_i32_10 : i32
    %13 = arith.index_cast %12 : i32 to index
    %14 = memref.load %arg2[%13] : memref<2xi32, #tpu.memory_space<smem>>
    %15 = vector.broadcast %14 : i32 to vector<2x1x8xi32>
    %16 = arith.select %11, %15, %9 : vector<2x1x8xi1>, vector<2x1x8xi32>
    %c1_i32 = arith.constant 1 : i32
    %17 = vector.broadcast %c1_i32 : i32 to vector<2x1x8xi32>
    %18 = arith.cmpi eq, %8, %17 : vector<2x1x8xi32>
    %c1_i32_11 = arith.constant 1 : i32
    %19 = arith.addi %6, %c1_i32_11 : i32
    %20 = arith.index_cast %19 : i32 to index
    %21 = memref.load %arg2[%20] : memref<2xi32, #tpu.memory_space<smem>>
    %22 = vector.broadcast %21 : i32 to vector<2x1x8xi32>
    %23 = arith.select %18, %22, %16 : vector<2x1x8xi1>, vector<2x1x8xi32>
    %24 = arith.cmpi slt, %7, %23 : vector<2x1x8xi32>
    %cst_12 = arith.constant -1.000000e+06 : f32
    %25 = vector.shape_cast %24 : vector<2x1x8xi1> to vector<2x1x8xi1>
    %26 = vector.broadcast %25 : vector<2x1x8xi1> to vector<2x8x8xi1>
    %27 = vector.broadcast %cst_12 : f32 to vector<2x8x8xf32>
    %28 = arith.select %26, %5, %27 : vector<2x8x8xi1>, vector<2x8x8xf32>
    %cst_13 = arith.constant dense<0xFF800000> : vector<2x8xf32>
    %29 = vector.multi_reduction <maximumf>, %28, %cst_13 [2] : vector<2x8x8xf32> to vector<2x8xf32>
    %30 = vector.shape_cast %29 : vector<2x8xf32> to vector<2x8x1xf32>
    %31 = vector.broadcast %30 : vector<2x8x1xf32> to vector<2x8x8xf32>
    %32 = arith.subf %28, %31 : vector<2x8x8xf32>
    %33 = math.exp %32 : vector<2x8x8xf32>
    %cst_14 = arith.constant dense<0.000000e+00> : vector<2x8xf32>
    %34 = vector.multi_reduction <add>, %33, %cst_14 [2] : vector<2x8x8xf32> to vector<2x8xf32>
    %35 = vector.shape_cast %34 : vector<2x8xf32> to vector<2x8x1xf32>
    %36 = vector.broadcast %35 : vector<2x8x1xf32> to vector<2x8x8xf32>
    %37 = arith.divf %33, %36 : vector<2x8x8xf32>
    %c0_15 = arith.constant 0 : index
    %c0_16 = arith.constant 0 : index
    %c0_17 = arith.constant 0 : index
    %38 = vector.load %arg7[%c0_15, %c0_16, %c0_17] : memref<2x8x8xf32, #tpu.memory_space<vmem>>, vector<2x8x8xf32>
    tpu.vector_store %arg7[%c0_15, %c0_16, %c0_17], %37 {strides = array<i32>} : memref<2x8x8xf32, #tpu.memory_space<vmem>>, vector<2x8x8xf32>,
    %cst_18 = arith.constant dense<0.000000e+00> : vector<2x8x32xf32>
    %39 = tpu.matmul %37, %4, %cst_18 {dimension_numbers = #tpu.dot_dimension_numbers<[2], [1], [1], [2], [0, 0, 0, 1, 1, 2], [0], [0]>} : vector<2x8x8xf32>, vector<2x8x32xf32>, vector<2x8x32xf32> -> vector<2x8x32xf32>
    %c0_19 = arith.constant 0 : index
    %c0_20 = arith.constant 0 : index
    %c0_21 = arith.constant 0 : index
    %40 = vector.load %arg6[%c0_19, %c0_20, %c0_21] : memref<2x8x32xf32, #tpu.memory_space<vmem>>, vector<2x8x32xf32>
    tpu.vector_store %arg6[%c0_19, %c0_20, %c0_21], %39 {strides = array<i32>} : memref<2x8x32xf32, #tpu.memory_space<vmem>>, vector<2x8x32xf32>,
    return
  }
  func.func @transform_0(%arg0: i32, %arg1: i32, %arg2: memref<2xi32, #tpu.memory_space<smem>>) -> (i32, i32, i32) {
    %c0_i32 = arith.constant 0 : i32
    %c0_i32_0 = arith.constant 0 : i32
    return %arg0, %arg1, %c0_i32 : i32, i32, i32
  }
  func.func @transform_1(%arg0: i32, %arg1: i32, %arg2: memref<2xi32, #tpu.memory_space<smem>>) -> (i32, i32, i32) {
    %c0_i32 = arith.constant 0 : i32
    %c0_i32_0 = arith.constant 0 : i32
    %c0_i32_1 = arith.constant 0 : i32
    return %arg0, %c0_i32, %c0_i32_0 : i32, i32, i32
  }
  func.func @transform_2(%arg0: i32, %arg1: i32, %arg2: memref<2xi32, #tpu.memory_space<smem>>) -> (i32, i32, i32) {
    %c0_i32 = arith.constant 0 : i32
    %c0_i32_0 = arith.constant 0 : i32
    %c0_i32_1 = arith.constant 0 : i32
    return %arg0, %c0_i32, %c0_i32_0 : i32, i32, i32
  }
  func.func @transform_3(%arg0: i32, %arg1: i32, %arg2: memref<2xi32, #tpu.memory_space<smem>>) -> (i32, i32, i32) {
    %c0_i32 = arith.constant 0 : i32
    %c0_i32_0 = arith.constant 0 : i32
    return %arg0, %arg1, %c0_i32 : i32, i32, i32
  }
  func.func @transform_4(%arg0: i32, %arg1: i32, %arg2: memref<2xi32, #tpu.memory_space<smem>>) -> (i32, i32, i32) {
    %c0_i32 = arith.constant 0 : i32
    %c0_i32_0 = arith.constant 0 : i32
    return %arg0, %arg1, %c0_i32 : i32, i32, i32
  }
}

</mosaic_0001>

<llo_original>
// kernel: tpu_custom_call.1
$region0: #{tpu_custom_call.1}
  #allocation0 [shape = 'u32[]', space=smem, size = 0x4, offset = 0x4, fixed_abs, tag = 'smem constant byte address 0x4 - core index']
  #allocation1 [shape = 'u32[144,128]{1,0:T(1,128)}', space=vmem, size = 0x12000, scoped, tag = 'internal scratch']
  #allocation2 [shape = 's32[1]{0}', space=sflag, size = 0x4, scoped, tag = 'scoped memory for tpu_custom_call.1']
  #allocation3 [shape = 'u8[512]{0}', space=smem, size = 0x200, scoped, tag = 'prefetched SMEM operand 0']
  %s0 = inlined_call_operand.hbm [shape: s32[2], index: 0, kind: input, shape index: {}]
  %s1 = inlined_call_operand.hbm [shape: f32[2,8,16], index: 1, kind: input, shape index: {}]
  %s2 = inlined_call_operand.hbm [shape: f32[2,8,16], index: 2, kind: input, shape index: {}]
  %s3 = inlined_call_operand.hbm [shape: f32[2,8,32], index: 3, kind: input, shape index: {}]
  %s4 = inlined_call_operand.hbm [shape: f32[2,8,32], index: 4, kind: output, shape index: {0}]
  %s5 = inlined_call_operand.hbm [shape: f32[2,8,8], index: 5, kind: output, shape index: {1}]
  %6 = xla_tuple %s4, %s5
  %s7 = sld [smem:[#allocation0]]
  $region42: #{tpu_custom_call.1} parent=0
    _
  %s9 = ssub.s32 1, %s7
  %s10 = scalar_select 0, %s9, %s7
  %12 = dma.hbm_to_smem %s0, 16, [#allocation3], [#allocation2]
  %13 = dma.done [#allocation2], 16
  %14 = sfence
  $region1: #{tpu_custom_call.1} parent=0
    #allocation4 [shape = 'u8[8192]{0}', space=vmem, size = 0x2000, scoped, tag = 'input window, operand 1, single buffered']
    #allocation5 [shape = 's32[1]{0}', space=sflag, size = 0x4, scoped, tag = 'scoped memory for tpu_custom_call.1']
    #allocation6 [shape = 's32[1]{0}', space=sflag, size = 0x4, scoped, tag = 'scoped memory for tpu_custom_call.1']
    #allocation7 [shape = 'u8[8192]{0}', space=vmem, size = 0x2000, scoped, tag = 'input window, operand 2, single buffered']
    #allocation8 [shape = 's32[1]{0}', space=sflag, size = 0x4, scoped, tag = 'scoped memory for tpu_custom_call.1']
    #allocation9 [shape = 'u8[8192]{0}', space=vmem, size = 0x2000, scoped, tag = 'input window, operand 3, single buffered']
    #allocation10 [shape = 'u8[8192]{0}', space=vmem, size = 0x2000, scoped, tag = 'output window, operand 0, single buffered']
    #allocation11 [shape = 'u8[8192]{0}', space=vmem, size = 0x2000, scoped, tag = 'output window, operand 1, single buffered']
    #allocation12 [shape = 's32[1]{0}', space=sflag, size = 0x4, scoped, tag = 'scoped memory for tpu_custom_call.1']
    %15 = vsyncpa [#allocation5], 0
    %16 = vsyncpa [#allocation8], 0
    %17 = vsyncpa [#allocation6], 0
    %18 = vsyncpa [#allocation12], 0
    // Predicated region
    $region2: #{tpu_custom_call.1} parent=1 // pred_check
      _
    $region3: #{tpu_custom_call.1} parent=1 // pred_check_branch
      %20 = sbr.rel (0) target = $region5
    $region4: #{tpu_custom_call.1} parent=1 // pred_region
      %s22 = ssub.s32 256, 256
      %23 = vsyncadd [#allocation5], %s22
      %s24 = sshll.u32 [#allocation4], 4
      %s25 = int_to_ptr.vmem [resolvable:$true] %s24
      %30 = dma.hbm_to_vmem [thread:$0]  %s1, 256, %s25, [#allocation5], 128, 128, 8
    $region5: #{tpu_custom_call.1} parent=1 // pred_fallthru
      _
    // Predicated region
    $region6: #{tpu_custom_call.1} parent=1 // pred_check
      _
    $region7: #{tpu_custom_call.1} parent=1 // pred_check_branch
      %32 = sbr.rel (0) target = $region9
    $region8: #{tpu_custom_call.1} parent=1 // pred_region
      %s34 = ssub.s32 256, 256
      %35 = vsyncadd [#allocation8], %s34
      %s36 = sshll.u32 [#allocation7], 4
      %s37 = int_to_ptr.vmem [resolvable:$true] %s36
      %42 = dma.hbm_to_vmem [thread:$0]  %s2, 256, %s37, [#allocation8], 128, 128, 8
    $region9: #{tpu_custom_call.1} parent=1 // pred_fallthru
      _
    // Predicated region
    $region10: #{tpu_custom_call.1} parent=1 // pred_check
      _
    $region11: #{tpu_custom_call.1} parent=1 // pred_check_branch
      %44 = sbr.rel (0) target = $region13
    $region12: #{tpu_custom_call.1} parent=1 // pred_region
      %s46 = ssub.s32 256, 256
      %47 = vsyncadd [#allocation8], %s46
      %s48 = sshll.u32 [#allocation9], 4
      %s49 = int_to_ptr.vmem [resolvable:$true] %s48
      %54 = dma.hbm_to_vmem [thread:$0]  %s3, 256, %s49, [#allocation8], 128, 128, 8
    $region13: #{tpu_custom_call.1} parent=1 // pred_fallthru
      _
    // Predicated region
    $region14: #{tpu_custom_call.1} parent=1 // pred_check
      _
    $region15: #{tpu_custom_call.1} parent=1 // pred_check_branch
      %56 = sbr.rel (0) target = $region17
    $region16: #{tpu_custom_call.1} parent=1 // pred_region
      %57 = dma.done [#allocation5], 256
    $region17: #{tpu_custom_call.1} parent=1 // pred_fallthru
      _
    // Predicated region
    $region18: #{tpu_custom_call.1} parent=1 // pred_check
      _
    $region19: #{tpu_custom_call.1} parent=1 // pred_check_branch
      %59 = sbr.rel (0) target = $region21
    $region20: #{tpu_custom_call.1} parent=1 // pred_region
      %60 = dma.done [#allocation8], 256
    $region21: #{tpu_custom_call.1} parent=1 // pred_fallthru
      _
    // Predicated region
    $region22: #{tpu_custom_call.1} parent=1 // pred_check
      _
    $region23: #{tpu_custom_call.1} parent=1 // pred_check_branch
      %62 = sbr.rel (0) target = $region25
    $region24: #{tpu_custom_call.1} parent=1 // pred_region
      %63 = dma.done [#allocation8], 256
    $region25: #{tpu_custom_call.1} parent=1 // pred_fallthru
      _
    %v64 = vld [vmem:[#allocation4] sm:$0xff]
    %v65 = vld [vmem:[#allocation4 + $0x8] sm:$0xff]
    %v66 = vmul.f32 %v64, 0.25
    %v67 = vmul.f32 %v65, 0.25
    %v68 = vld [vmem:[#allocation7] sm:$0xff]
    %v69 = vld [vmem:[#allocation7 + $0x8] sm:$0xff]
    %v70 = vld [vmem:[#allocation9] sm:$0xff]
    %v71 = vld [vmem:[#allocation9 + $0x8] sm:$0xff]
    %vm72 = vcmask 130048
    %v74 = vsel %vm72, %v66, 0
    %v77 = vsel %vm72, %v68, 0
    %79 = vmatprep.subr.mxu0 0.0
    %80 = vmatpush1.xpose.msra.mxu0 %v77
    %81 = vmatprep.subr.mxu0 0.0
    %82 = vmatpush1.xpose.msra.mxu0 0.0
    %83 = vmatprep.subr.mxu0 0.0
    %84 = vmatpush1.xpose.msra.mxu0 0.0
    %85 = vmatprep.subr.mxu0 0.0
    %86 = vmatpush1.xpose.msra.mxu0 0.0
    %87 = vmatprep.subr.mxu0 0.0
    %88 = vmatpush1.xpose.msra.mxu0 0.0
    %89 = vmatprep.subr.mxu0 0.0
    %90 = vmatpush1.xpose.msra.mxu0 0.0
    %91 = vmatprep.subr.mxu0 0.0
    %92 = vmatpush1.xpose.msra.mxu0 0.0
    %93 = vmatprep.subr.mxu0 0.0
    %94 = vmatpush1.xpose.msra.mxu0 0.0
    %95 = vmatprep.subr.mxu0 0.0
    %96 = vmatpush1.xpose.msra.mxu0 0.0
    %97 = vmatprep.subr.mxu0 0.0
    %98 = vmatpush1.xpose.msra.mxu0 0.0
    %99 = vmatprep.subr.mxu0 0.0
    %100 = vmatpush1.xpose.msra.mxu0 0.0
    %101 = vmatprep.subr.mxu0 0.0
    %102 = vmatpush1.xpose.msra.mxu0 0.0
    %103 = vmatprep.subr.mxu0 0.0
    %104 = vmatpush1.xpose.msra.mxu0 0.0
    %105 = vmatprep.subr.mxu0 0.0
    %106 = vmatpush1.xpose.msra.mxu0 0.0
    %107 = vmatprep.subr.mxu0 0.0
    %108 = vmatpush1.xpose.msra.mxu0 0.0
    %109 = vmatprep.subr.mxu0 0.0
    %110 = vmatpush1.xpose.msra.mxu0 0.0
    %111 = vmatprep.subr.mxu0 0.0
    %112 = vmatpush1.xpose.msra.mxu0 0.0
    %113 = vmatprep.subr.mxu0 0.0
    %114 = vmatpush1.xpose.msra.mxu0 0.0
    %115 = vmatprep.subr.mxu0 0.0
    %116 = vmatpush1.xpose.msra.mxu0 0.0
    %117 = vmatprep.subr.mxu0 0.0
    %118 = vmatpush1.xpose.msra.mxu0 0.0
    %119 = vmatprep.subr.mxu0 0.0
    %120 = vmatpush1.xpose.msra.mxu0 0.0
    %121 = vmatprep.subr.mxu0 0.0
    %122 = vmatpush1.xpose.msra.mxu0 0.0
    %123 = vmatprep.subr.mxu0 0.0
    %124 = vmatpush1.xpose.msra.mxu0 0.0
    %125 = vmatprep.subr.mxu0 0.0
    %126 = vmatpush1.xpose.msra.mxu0 0.0
    %127 = vmatprep.subr.mxu0 0.0
    %128 = vmatpush1.xpose.msra.mxu0 0.0
    %129 = vmatprep.subr.mxu0 0.0
    %130 = vmatpush1.xpose.msra.mxu0 0.0
    %131 = vmatprep.subr.mxu0 0.0
    %132 = vmatpush1.xpose.msra.mxu0 0.0
    %133 = vmatprep.subr.mxu0 0.0
    %134 = vmatpush1.xpose.msra.mxu0 0.0
    %135 = vmatprep.subr.mxu0 0.0
    %136 = vmatpush1.xpose.msra.mxu0 0.0
    %137 = vmatprep.subr.mxu0 0.0
    %138 = vmatpush1.xpose.msra.mxu0 0.0
    %139 = vmatprep.subr.mxu0 0.0
    %140 = vmatpush1.xpose.msra.mxu0 0.0
    %141 = vmatprep.subr.mxu0 0.0
    %142 = vmatpush1.xpose.msra.mxu0 0.0
    %143 = vmatprep.mubr.f32.mxu0 0.0
    %144 = vmatmul.mubr.f32.gmra.mrb[0].mxu0 %v74
    %v145 = vpop.f32.mrb[0].mxu0
    %v146 = vadd.f32 0.0, %v145
    %v147 = vpop.f32.mrb[0].mxu0
    %148 = vdwg.mxu0
    %v150 = vsel %vm72, %v67, 0
    %v153 = vsel %vm72, %v69, 0
    %155 = vmatprep.subr.mxu0 0.0
    %156 = vmatpush1.xpose.msra.mxu0 %v153
    %157 = vmatprep.subr.mxu0 0.0
    %158 = vmatpush1.xpose.msra.mxu0 0.0
    %159 = vmatprep.subr.mxu0 0.0
    %160 = vmatpush1.xpose.msra.mxu0 0.0
    %161 = vmatprep.subr.mxu0 0.0
    %162 = vmatpush1.xpose.msra.mxu0 0.0
    %163 = vmatprep.subr.mxu0 0.0
    %164 = vmatpush1.xpose.msra.mxu0 0.0
    %165 = vmatprep.subr.mxu0 0.0
    %166 = vmatpush1.xpose.msra.mxu0 0.0
    %167 = vmatprep.subr.mxu0 0.0
    %168 = vmatpush1.xpose.msra.mxu0 0.0
    %169 = vmatprep.subr.mxu0 0.0
    %170 = vmatpush1.xpose.msra.mxu0 0.0
    %171 = vmatprep.subr.mxu0 0.0
    %172 = vmatpush1.xpose.msra.mxu0 0.0
    %173 = vmatprep.subr.mxu0 0.0
    %174 = vmatpush1.xpose.msra.mxu0 0.0
    %175 = vmatprep.subr.mxu0 0.0
    %176 = vmatpush1.xpose.msra.mxu0 0.0
    %177 = vmatprep.subr.mxu0 0.0
    %178 = vmatpush1.xpose.msra.mxu0 0.0
    %179 = vmatprep.subr.mxu0 0.0
    %180 = vmatpush1.xpose.msra.mxu0 0.0
    %181 = vmatprep.subr.mxu0 0.0
    %182 = vmatpush1.xpose.msra.mxu0 0.0
    %183 = vmatprep.subr.mxu0 0.0
    %184 = vmatpush1.xpose.msra.mxu0 0.0
    %185 = vmatprep.subr.mxu0 0.0
    %186 = vmatpush1.xpose.msra.mxu0 0.0
    %187 = vmatprep.subr.mxu0 0.0
    %188 = vmatpush1.xpose.msra.mxu0 0.0
    %189 = vmatprep.subr.mxu0 0.0
    %190 = vmatpush1.xpose.msra.mxu0 0.0
    %191 = vmatprep.subr.mxu0 0.0
    %192 = vmatpush1.xpose.msra.mxu0 0.0
    %193 = vmatprep.subr.mxu0 0.0
    %194 = vmatpush1.xpose.msra.mxu0 0.0
    %195 = vmatprep.subr.mxu0 0.0
    %196 = vmatpush1.xpose.msra.mxu0 0.0
    %197 = vmatprep.subr.mxu0 0.0
    %198 = vmatpush1.xpose.msra.mxu0 0.0
    %199 = vmatprep.subr.mxu0 0.0
    %200 = vmatpush1.xpose.msra.mxu0 0.0
    %201 = vmatprep.subr.mxu0 0.0
    %202 = vmatpush1.xpose.msra.mxu0 0.0
    %203 = vmatprep.subr.mxu0 0.0
    %204 = vmatpush1.xpose.msra.mxu0 0.0
    %205 = vmatprep.subr.mxu0 0.0
    %206 = vmatpush1.xpose.msra.mxu0 0.0
    %207 = vmatprep.subr.mxu0 0.0
    %208 = vmatpush1.xpose.msra.mxu0 0.0
    %209 = vmatprep.subr.mxu0 0.0
    %210 = vmatpush1.xpose.msra.mxu0 0.0
    %211 = vmatprep.subr.mxu0 0.0
    %212 = vmatpush1.xpose.msra.mxu0 0.0
    %213 = vmatprep.subr.mxu0 0.0
    %214 = vmatpush1.xpose.msra.mxu0 0.0
    %215 = vmatprep.subr.mxu0 0.0
    %216 = vmatpush1.xpose.msra.mxu0 0.0
    %217 = vmatprep.subr.mxu0 0.0
    %218 = vmatpush1.xpose.msra.mxu0 0.0
    %219 = vmatprep.mubr.f32.mxu0 0.0
    %220 = vmatmul.mubr.f32.gmra.mrb[0].mxu0 %v150
    %v221 = vpop.f32.mrb[0].mxu0
    %v222 = vadd.f32 0.0, %v221
    %v223 = vpop.f32.mrb[0].mxu0
    %224 = vdwg.mxu0
    %s225 = smul.u32 0, 2
    %v226 = vlaneseq
    %v227 = vand.u32 %v226, 127
    %s228 = sld [smem:[#allocation3 + %s225]]
    %v229 = vstv %s228
    %s230 = sadd.s32 %s225, 1
    %s231 = sld [smem:[#allocation3 + %s230]]
    %v232 = vstv %s231
    %vm233 = vcmp.lt.s32.totalorder %v227, %v229
    %vm234 = vcmp.lt.s32.totalorder %v227, %v232
    %v235 = vsel %vm233, 1, 0
    %v236 = vsel %vm234, 1, 0
    %vm237 = vcmp.eq.s32.totalorder %v235, 1
    %vm238 = vcmp.eq.s32.totalorder %v236, 1
    %v239 = vsel %vm237, %v146, -1000000.0
    %v240 = vsel %vm238, %v222, -1000000.0
    %vm241 = vcmask 64512
    %v242 = vsel %vm241, %v239, -inf
    %243 = vmax.xlane.f32.xlu0 %v242
    %v244 = vpop.xlane.xlu0 %243
    %v245 = vsel %vm241, %v240, -inf
    %246 = vmax.xlane.f32.xlu0 %v245
    %v247 = vpop.xlane.xlu0 %246
    %v248 = vsub.f32 %v239, %v244
    %v249 = vsub.f32 %v240, %v247
    %v250 = vmul.f32 %v248, 1.442695
    %v251 = vpow.pop %v250
    %v252 = vmul.f32 %v249, 1.442695
    %v253 = vpow.pop %v252
    %v254 = vsel %vm241, %v251, 0.0
    %255 = vadd.xlane.f32.xlu0 %v254
    %v256 = vpop.xlane.xlu0 %255
    %v257 = vsel %vm241, %v253, 0.0
    %258 = vadd.xlane.f32.xlu0 %v257
    %v259 = vpop.xlane.xlu0 %258
    %v260 = vrcp.pop %v256
    %v261 = vmul.f32 %v251, %v260
    %v262 = vrcp.pop %v259
    %v263 = vmul.f32 %v253, %v262
    %264 = vst.msk [vmem:[#allocation11] sm:$0xff] %vm241, %v261
    %265 = vst.msk [vmem:[#allocation11 + $0x8] sm:$0xff] %vm241, %v263
    %v267 = vsel %vm241, %v261, 0
    %269 = vmatprep.subr.mxu0 0.0
    %270 = vmatpush1.msra.mxu0 %v70
    %271 = vmatprep.subr.mxu0 0.0
    %272 = vmatpush1.msra.mxu0 0.0
    %273 = vmatprep.subr.mxu0 0.0
    %274 = vmatpush1.msra.mxu0 0.0
    %275 = vmatprep.subr.mxu0 0.0
    %276 = vmatpush1.msra.mxu0 0.0
    %277 = vmatprep.subr.mxu0 0.0
    %278 = vmatpush1.msra.mxu0 0.0
    %279 = vmatprep.subr.mxu0 0.0
    %280 = vmatpush1.msra.mxu0 0.0
    %281 = vmatprep.subr.mxu0 0.0
    %282 = vmatpush1.msra.mxu0 0.0
    %283 = vmatprep.subr.mxu0 0.0
    %284 = vmatpush1.msra.mxu0 0.0
    %285 = vmatprep.subr.mxu0 0.0
    %286 = vmatpush1.msra.mxu0 0.0
    %287 = vmatprep.subr.mxu0 0.0
    %288 = vmatpush1.msra.mxu0 0.0
    %289 = vmatprep.subr.mxu0 0.0
    %290 = vmatpush1.msra.mxu0 0.0
    %291 = vmatprep.subr.mxu0 0.0
    %292 = vmatpush1.msra.mxu0 0.0
    %293 = vmatprep.subr.mxu0 0.0
    %294 = vmatpush1.msra.mxu0 0.0
    %295 = vmatprep.subr.mxu0 0.0
    %296 = vmatpush1.msra.mxu0 0.0
    %297 = vmatprep.subr.mxu0 0.0
    %298 = vmatpush1.msra.mxu0 0.0
    %299 = vmatprep.subr.mxu0 0.0
    %300 = vmatpush1.msra.mxu0 0.0
    %301 = vmatprep.subr.mxu0 0.0
    %302 = vmatpush1.msra.mxu0 0.0
    %303 = vmatprep.subr.mxu0 0.0
    %304 = vmatpush1.msra.mxu0 0.0
    %305 = vmatprep.subr.mxu0 0.0
    %306 = vmatpush1.msra.mxu0 0.0
    %307 = vmatprep.subr.mxu0 0.0
    %308 = vmatpush1.msra.mxu0 0.0
    %309 = vmatprep.subr.mxu0 0.0
    %310 = vmatpush1.msra.mxu0 0.0
    %311 = vmatprep.subr.mxu0 0.0
    %312 = vmatpush1.msra.mxu0 0.0
    %313 = vmatprep.subr.mxu0 0.0
    %314 = vmatpush1.msra.mxu0 0.0
    %315 = vmatprep.subr.mxu0 0.0
    %316 = vmatpush1.msra.mxu0 0.0
    %317 = vmatprep.subr.mxu0 0.0
    %318 = vmatpush1.msra.mxu0 0.0
    %319 = vmatprep.subr.mxu0 0.0
    %320 = vmatpush1.msra.mxu0 0.0
    %321 = vmatprep.subr.mxu0 0.0
    %322 = vmatpush1.msra.mxu0 0.0
    %323 = vmatprep.subr.mxu0 0.0
    %324 = vmatpush1.msra.mxu0 0.0
    %325 = vmatprep.subr.mxu0 0.0
    %326 = vmatpush1.msra.mxu0 0.0
    %327 = vmatprep.subr.mxu0 0.0
    %328 = vmatpush1.msra.mxu0 0.0
    %329 = vmatprep.subr.mxu0 0.0
    %330 = vmatpush1.msra.mxu0 0.0
    %331 = vmatprep.subr.mxu0 0.0
    %332 = vmatpush1.msra.mxu0 0.0
    %333 = vmatprep.mubr.f32.mxu0 0.0
    %334 = vmatmul.mubr.f32.gmra.mrb[0].mxu0 %v267
    %v335 = vpop.f32.mrb[0].mxu0
    %v336 = vadd.f32 0.0, %v335
    %v337 = vpop.f32.mrb[0].mxu0
    %338 = vdwg.mxu0
    %v340 = vsel %vm241, %v263, 0
    %342 = vmatprep.subr.mxu0 0.0
    %343 = vmatpush1.msra.mxu0 %v71
    %344 = vmatprep.subr.mxu0 0.0
    %345 = vmatpush1.msra.mxu0 0.0
    %346 = vmatprep.subr.mxu0 0.0
    %347 = vmatpush1.msra.mxu0 0.0
    %348 = vmatprep.subr.mxu0 0.0
    %349 = vmatpush1.msra.mxu0 0.0
    %350 = vmatprep.subr.mxu0 0.0
    %351 = vmatpush1.msra.mxu0 0.0
    %352 = vmatprep.subr.mxu0 0.0
    %353 = vmatpush1.msra.mxu0 0.0
    %354 = vmatprep.subr.mxu0 0.0
    %355 = vmatpush1.msra.mxu0 0.0
    %356 = vmatprep.subr.mxu0 0.0
    %357 = vmatpush1.msra.mxu0 0.0
    %358 = vmatprep.subr.mxu0 0.0
    %359 = vmatpush1.msra.mxu0 0.0
    %360 = vmatprep.subr.mxu0 0.0
    %361 = vmatpush1.msra.mxu0 0.0
    %362 = vmatprep.subr.mxu0 0.0
    %363 = vmatpush1.msra.mxu0 0.0
    %364 = vmatprep.subr.mxu0 0.0
    %365 = vmatpush1.msra.mxu0 0.0
    %366 = vmatprep.subr.mxu0 0.0
    %367 = vmatpush1.msra.mxu0 0.0
    %368 = vmatprep.subr.mxu0 0.0
    %369 = vmatpush1.msra.mxu0 0.0
    %370 = vmatprep.subr.mxu0 0.0
    %371 = vmatpush1.msra.mxu0 0.0
    %372 = vmatprep.subr.mxu0 0.0
    %373 = vmatpush1.msra.mxu0 0.0
    %374 = vmatprep.subr.mxu0 0.0
    %375 = vmatpush1.msra.mxu0 0.0
    %376 = vmatprep.subr.mxu0 0.0
    %377 = vmatpush1.msra.mxu0 0.0
    %378 = vmatprep.subr.mxu0 0.0
    %379 = vmatpush1.msra.mxu0 0.0
    %380 = vmatprep.subr.mxu0 0.0
    %381 = vmatpush1.msra.mxu0 0.0
    %382 = vmatprep.subr.mxu0 0.0
    %383 = vmatpush1.msra.mxu0 0.0
    %384 = vmatprep.subr.mxu0 0.0
    %385 = vmatpush1.msra.mxu0 0.0
    %386 = vmatprep.subr.mxu0 0.0
    %387 = vmatpush1.msra.mxu0 0.0
    %388 = vmatprep.subr.mxu0 0.0
    %389 = vmatpush1.msra.mxu0 0.0
    %390 = vmatprep.subr.mxu0 0.0
    %391 = vmatpush1.msra.mxu0 0.0
    %392 = vmatprep.subr.mxu0 0.0
    %393 = vmatpush1.msra.mxu0 0.0
    %394 = vmatprep.subr.mxu0 0.0
    %395 = vmatpush1.msra.mxu0 0.0
    %396 = vmatprep.subr.mxu0 0.0
    %397 = vmatpush1.msra.mxu0 0.0
    %398 = vmatprep.subr.mxu0 0.0
    %399 = vmatpush1.msra.mxu0 0.0
    %400 = vmatprep.subr.mxu0 0.0
    %401 = vmatpush1.msra.mxu0 0.0
    %402 = vmatprep.subr.mxu0 0.0
    %403 = vmatpush1.msra.mxu0 0.0
    %404 = vmatprep.subr.mxu0 0.0
    %405 = vmatpush1.msra.mxu0 0.0
    %406 = vmatprep.mubr.f32.mxu0 0.0
    %407 = vmatmul.mubr.f32.gmra.mrb[0].mxu0 %v340
    %v408 = vpop.f32.mrb[0].mxu0
    %v409 = vadd.f32 0.0, %v408
    %v410 = vpop.f32.mrb[0].mxu0
    %411 = vdwg.mxu0
    %vm412 = vcmask 261120
    %413 = vst.msk [vmem:[#allocation10] sm:$0xff] %vm412, %v336
    %414 = vst.msk [vmem:[#allocation10 + $0x8] sm:$0xff] %vm412, %v409
    // Predicated region
    $region26: #{tpu_custom_call.1} parent=1 // pred_check
      _
    $region27: #{tpu_custom_call.1} parent=1 // pred_check_branch
      %416 = sbr.rel (0) target = $region29
    $region28: #{tpu_custom_call.1} parent=1 // pred_region
      %s418 = ssub.s32 256, 256
      %419 = vsyncadd [#allocation6], %s418
      %s420 = sshll.u32 [#allocation10], 4
      %s421 = int_to_ptr.vmem [resolvable:$true] %s420
      %426 = dma.vmem_to_hbm [thread:$0]  %s421, 256, %s4, [#allocation6], 128, 128, 8
    $region29: #{tpu_custom_call.1} parent=1 // pred_fallthru
      _
    // Predicated region
    $region30: #{tpu_custom_call.1} parent=1 // pred_check
      _
    $region31: #{tpu_custom_call.1} parent=1 // pred_check_branch
      %428 = sbr.rel (0) target = $region33
    $region32: #{tpu_custom_call.1} parent=1 // pred_region
      %s430 = ssub.s32 256, 256
      %431 = vsyncadd [#allocation12], %s430
      %s432 = sshll.u32 [#allocation11], 4
      %s433 = int_to_ptr.vmem [resolvable:$true] %s432
      %438 = dma.vmem_to_hbm [thread:$0]  %s433, 256, %s5, [#allocation12], 128, 128, 8
    $region33: #{tpu_custom_call.1} parent=1 // pred_fallthru
      _
    // Predicated region
    $region34: #{tpu_custom_call.1} parent=1 // pred_check
      _
    $region35: #{tpu_custom_call.1} parent=1 // pred_check_branch
      %440 = sbr.rel (0) target = $region37
    $region36: #{tpu_custom_call.1} parent=1 // pred_region
      %441 = dma.done [#allocation6], 256
    $region37: #{tpu_custom_call.1} parent=1 // pred_fallthru
      _
    // Predicated region
    $region38: #{tpu_custom_call.1} parent=1 // pred_check
      _
    $region39: #{tpu_custom_call.1} parent=1 // pred_check_branch
      %443 = sbr.rel (0) target = $region41
    $region40: #{tpu_custom_call.1} parent=1 // pred_region
      %444 = dma.done [#allocation12], 256
    $region41: #{tpu_custom_call.1} parent=1 // pred_fallthru
      _
    %445 = vsyncpa [#allocation5], 1
    %446 = vsyncpa [#allocation8], 1
    %447 = vsyncpa [#allocation6], 1
    %448 = vsyncpa [#allocation12], 1

</llo_original>
